<compile_context>
chip_gen: v7x
topology: tpu7x:2x2x1
jax: 0.10.0
libtpu: 0.0.40
codegen_flags: <defaults>
</compile_context>

<pallas_src>
import math

import jax
import jax.numpy as jnp
from jax.experimental import pallas as pl
from jax.experimental.pallas import tpu as pltpu


def _pick_head_block(nh, hn, tq, tk):
    """Number of heads processed per grid step.

    Bounded so the per-step f32 (hb, tq, tk) score/prob temporaries stay at a
    few MiB (VMEM-friendly on v7x), while preferring hb*hn to be a multiple of
    128 so the output block is lane-dense."""
    by_lanes = max(1, 128 // max(hn, 1))
    by_vmem = max(1, (4 * 1024 * 1024) // max(1, tq * tk * 4))
    target = max(1, min(by_lanes, by_vmem, nh))
    for hb in range(target, 0, -1):
        if nh % hb == 0:
            return hb
    return 1


def _vmem_limit_bytes(default=48 << 20):
    """Scoped-VMEM budget: generous on 128 MiB chips, safe on v7x (64 MiB)."""
    try:
        cap = int(pltpu.get_tpu_info().vmem_capacity_bytes)
        return int(min(max(cap - (16 << 20), 32 << 20), 112 << 20))
    except Exception:
        return default


def _make_flash_kernel(*, hb, hn, sk, tk, n_q, n_kv, n_hb_tbl,
                       has_mask, mask_over_batch, mask_over_heads,
                       kv_oob, direct_out, compute_dtype):
    """Builds the flash-attention kernel body with static config baked in."""

    def kernel(*args):
        if has_mask:
            (tbl_ref, q_ref, k_ref, v_ref, mask_ref,
             o_ref, m_scr, l_scr, acc_scr) = args
        else:
            q_ref, k_ref, v_ref, o_ref, m_scr, l_scr, acc_scr = args

        bi = pl.program_id(0)
        hi = pl.program_id(1)
        qi = pl.program_id(2)
        ki = pl.program_id(3)

        @pl.when(ki == 0)
        def _init():
            # Large finite negative (not -inf) so fully-masked rows stay
            # NaN-free and reproduce torch's uniform softmax over -10000.
            m_scr[...] = jnp.full_like(m_scr, -1e30)
            l_scr[...] = jnp.zeros_like(l_scr)
            acc_scr[...] = jnp.zeros_like(acc_scr)

        def _step():
            q = q_ref[0]   # (hb, tq, hn)  compute dtype, pre-scaled by 1/sqrt(hn)
            k = k_ref[0]   # (hb, hn, tk)  compute dtype (K pre-transposed -> native RHS)
            v = v_ref[0]   # (hb, tk, hn)  compute dtype

            # scores: (hb, tq, tk) — low-precision operands, f32 accumulation.
            s = jnp.einsum('hqd,hdk->hqk', q, k,
                           preferred_element_type=jnp.float32)

            if has_mask:
                # torch masked_fill_(mask, -10000.0): SET (not add) where True.
                s = jnp.where(mask_ref[0] != 0, jnp.float32(-10000.0), s)

            if kv_oob:
                # Last kv tile runs past sk when sk % tk != 0: kill padded
                # columns.  Must stay AFTER the mask select (OOB mask bytes
                # are unspecified).
                kv_pos = ki * tk + jax.lax.broadcasted_iota(
                    jnp.int32, (1, 1, tk), 2)
                s = jnp.where(kv_pos < sk, s, jnp.float32(-1e30))

            # Online softmax update.  Exponent in compute dtype (bf16 EUP on
            # v6e/v7x); l / acc stay in f32.
            m_prev = m_scr[...]                                   # (hb, tq, 1)
            m_new = jnp.maximum(m_prev, jnp.max(s, axis=-1, keepdims=True))
            alpha = jnp.exp(m_prev - m_new)                       # f32
            p = jnp.exp((s - m_new).astype(compute_dtype))        # (hb, tq, tk)
            l_scr[...] = alpha * l_scr[...] + jnp.sum(
                p.astype(jnp.float32), axis=-1, keepdims=True)
            acc_scr[...] = alpha * acc_scr[...] + jnp.einsum(
                'hqk,hkd->hqd', p, v, preferred_element_type=jnp.float32)
            m_scr[...] = m_new

        if has_mask:
            # Block-sparse skip: the prefetched table says whether this
            # (batch, head-group, q-tile, kv-tile) has any unmasked entry.
            tb = bi if mask_over_batch else 0
            th = hi if mask_over_heads else 0
            flat = ((tb * n_hb_tbl + th) * n_q + qi) * n_kv + ki
            pl.when(tbl_ref[flat] != 0)(_step)
        else:
            _step()

        @pl.when(ki == pl.num_programs(3) - 1)
        def _finalize():
            # Normalize once per output tile; reciprocal runs on the EUP slot.
            inv_l = pl.reciprocal(l_scr[...], approx=True)        # (hb, tq, 1)
            ctx = acc_scr[...] * inv_l                            # (hb, tq, hn)
            if direct_out:
                # hb <= 4 unrolled slice stores into the lane-dense (tq, hb*hn)
                # block; avoids an in-kernel (hb, tq, hn) relayout and only
                # runs once per output tile.
                for h in range(hb):
                    o_ref[:, h * hn:(h + 1) * hn] = ctx[h].astype(o_ref.dtype)
            else:
                o_ref[0] = ctx.astype(o_ref.dtype)

    return kernel


def dot_product_attention(query, key, value, attention_mask=None, *,
                          kv_channels, num_attention_heads,
                          attention_dropout=0.0,
                          compute_dtype=jnp.bfloat16,
                          out_dtype=None,
                          q_block=512, kv_block=512):
    """query/key/value: (seq, batch, num_heads, head_dim).
    attention_mask: optional bool/int, broadcastable to (b, nh, sq, sk);
    True means "mask out" (set to -10000 before softmax).
    Returns (sq, batch, num_heads*head_dim) in query.dtype (or `out_dtype`)."""
    # TODO(synk): attention dropout (p>0 / training) not implemented; with
    # attention_dropout=0.0 / eval mode torch's Dropout is the identity.
    sq, b, nh, hn = query.shape
    sk = key.shape[0]
    assert nh == num_attention_heads and hn == kv_channels
    proj = nh * hn
    scale = 1.0 / math.sqrt(hn)
    out_dtype = query.dtype if out_dtype is None else out_dtype

    # Tile sizes: full extent when small, otherwise aligned tiles.
    tq = sq if sq <= q_block else max(8, (q_block // 8) * 8)
    tk = sk if sk <= kv_block else max(128, (kv_block // 128) * 128)
    n_q = pl.cdiv(sq, tq)
    n_kv = pl.cdiv(sk, tk)
    kv_oob = (sk % tk) != 0

    hb = _pick_head_block(nh, hn, tq, tk)
    n_hb = nh // hb

    # Layout prep (all fold into the transpose+cast copies for free):
    #   Q: (b, nh, sq, hn), pre-scaled by 1/sqrt(hn)
    #   K: (b, nh, hn, sk)  -> native MXU RHS orientation, lane-dense for hn<128
    #   V: (b, nh, sk, hn)
    q_t = (jnp.transpose(query, (1, 2, 0, 3)) * scale).astype(compute_dtype)
    k_t = jnp.transpose(key, (1, 2, 3, 0)).astype(compute_dtype)
    v_t = jnp.transpose(value, (1, 2, 0, 3)).astype(compute_dtype)

    has_mask = attention_mask is not None
    prefetch_args = ()
    mask_args = ()
    mask_specs = []
    num_prefetch = 0
    mask_over_batch = mask_over_heads = False
    n_hb_tbl = 1
    mask_bytes = 0
    if has_mask:
        m4 = jnp.asarray(attention_mask)
        m4 = jnp.reshape(m4, (1,) * (4 - m4.ndim) + tuple(m4.shape))
        mb = b if m4.shape[0] != 1 else 1
        mh = nh if m4.shape[1] != 1 else 1
        # Keep the mask int8 and un-replicated over broadcast dims in HBM.
        m4 = jnp.broadcast_to(m4, (mb, mh, sq, sk)).astype(jnp.int8)
        mask_over_batch = mb != 1
        mask_over_heads = mh != 1
        mhb = hb if mask_over_heads else 1
        n_hb_tbl = n_hb if mask_over_heads else 1
        mask_bytes = int(m4.size)

        # Block-skip table: 1 iff any unmasked entry in the tile.  A row group
        # whose kv tiles are ALL fully masked is forced to run so it follows
        # the -10000 path (torch's uniform softmax for fully-masked rows).
        pad_q = n_q * tq - sq
        pad_k = n_kv * tk - sk
        mp = jnp.pad(m4, ((0, 0), (0, 0), (0, pad_q), (0, pad_k)),
                     constant_values=1)
        mpr = mp.reshape(mb, n_hb_tbl, mhb, n_q, tq, n_kv, tk)
        tile_live = jnp.any(mpr == 0, axis=(2, 4, 6))   # (mb, n_hb_tbl, n_q, n_kv)
        row_live = jnp.any(tile_live, axis=-1, keepdims=True)
        run_tbl = jnp.where(row_live, tile_live, True)
        prefetch_args = (run_tbl.reshape(-1).astype(jnp.int32),)
        num_prefetch = 1

        def mask_idx(bi, hi, qi, ki, *_):
            return (bi if mb != 1 else 0, hi if mh != 1 else 0, qi, ki)
        mask_specs = [pl.BlockSpec((1, mhb, tq, tk), mask_idx)]
        mask_args = (m4,)

    # Output: lane-dense (tq, hb*hn) blocks of a flat (sq, b*proj) array when
    # possible (reshapes for free into (sq, b, proj)); otherwise a
    # (b, nh, sq, hn) array + one wrapper transpose.
    direct_out = ((hb * hn) % 128 == 0) or (b == 1 and n_hb == 1)
    if direct_out:
        out_shape = jax.ShapeDtypeStruct((sq, b * proj), out_dtype)
        out_spec = pl.BlockSpec(
            (tq, hb * hn), lambda bi, hi, qi, ki, *_: (qi, bi * n_hb + hi))
    else:
        out_shape = jax.ShapeDtypeStruct((b, nh, sq, hn), out_dtype)
        out_spec = pl.BlockSpec(
            (1, hb, tq, hn), lambda bi, hi, qi, ki, *_: (bi, hi, qi, 0))

    in_specs = [
        pl.BlockSpec((1, hb, tq, hn), lambda bi, hi, qi, ki, *_: (bi, hi, qi, 0)),
        pl.BlockSpec((1, hb, hn, tk), lambda bi, hi, qi, ki, *_: (bi, hi, 0, ki)),
        pl.BlockSpec((1, hb, tk, hn), lambda bi, hi, qi, ki, *_: (bi, hi, ki, 0)),
        *mask_specs,
    ]

    c_bytes = jnp.dtype(compute_dtype).itemsize
    bytes_accessed = int(
        b * nh * sq * hn * c_bytes                        # Q streamed once
        + n_q * (2 * b * nh * sk * hn * c_bytes)          # K + V, refetched per q tile
        + n_q * mask_bytes                                # mask, refetched per q tile
        + sq * b * proj * jnp.dtype(out_dtype).itemsize)  # output
    cost = pl.CostEstimate(flops=int(4 * b * nh * sq * sk * hn),
                           transcendentals=int(b * nh * sq * sk),
                           bytes_accessed=bytes_accessed)

    kernel = _make_flash_kernel(
        hb=hb, hn=hn, sk=sk, tk=tk, n_q=n_q, n_kv=n_kv, n_hb_tbl=n_hb_tbl,
        has_mask=has_mask, mask_over_batch=mask_over_batch,
        mask_over_heads=mask_over_heads, kv_oob=kv_oob,
        direct_out=direct_out, compute_dtype=compute_dtype)

    out = pl.pallas_call(
        kernel,
        out_shape=out_shape,
        grid_spec=pltpu.PrefetchScalarGridSpec(
            num_scalar_prefetch=num_prefetch,
            grid=(b, n_hb, n_q, n_kv),
            in_specs=in_specs,
            out_specs=out_spec,
            scratch_shapes=[
                pltpu.VMEM((hb, tq, 1), jnp.float32),    # running max m
                pltpu.VMEM((hb, tq, 1), jnp.float32),    # running denom l
                pltpu.VMEM((hb, tq, hn), jnp.float32),   # unnormalized context
            ],
        ),
        compiler_params=pltpu.CompilerParams(
            dimension_semantics=("parallel", "parallel", "parallel", "arbitrary"),
            vmem_limit_bytes=_vmem_limit_bytes()),
        cost_estimate=cost,
    )(*prefetch_args, q_t, k_t, v_t, *mask_args)

    if direct_out:
        return out.reshape(sq, b, proj)
    return jnp.transpose(out, (2, 0, 1, 3)).reshape(sq, b, proj)


def _reference(query, key, value, attention_mask, norm_factor,
               compute_dtype=None):
    """Pure-JAX mirror of the torch module.  With `compute_dtype` set, the
    operands AND the softmax exponent are rounded to it at the same points as
    the kernel (precision-matched reference for the bf16 MXU/EUP path)."""
    f32 = jnp.float32
    if compute_dtype is not None:
        q = (query * (1.0 / norm_factor)).astype(compute_dtype).astype(f32)
        k = key.astype(compute_dtype).astype(f32)
        v = value.astype(compute_dtype).astype(f32)
        scores = jnp.einsum("sbnh,tbnh->bnst", q, k)
    else:
        v = value
        scores = jnp.einsum("sbnh,tbnh->bnst", query, key) / norm_factor
    if attention_mask is not None:
        scores = jnp.where(jnp.broadcast_to(attention_mask, scores.shape),
                           -10000.0, scores)
    if compute_dtype is not None:
        m = jnp.max(scores, axis=-1, keepdims=True)
        p = jnp.exp((scores - m).astype(compute_dtype)).astype(f32)
        probs = p / jnp.sum(p, axis=-1, keepdims=True)
    else:
        probs = jax.nn.softmax(scores, axis=-1)
    ctx = jnp.einsum("bnst,tbnh->sbnh", probs, v)
    sq, b, nh, hn = query.shape
    return ctx.reshape(sq, b, nh * hn)


if __name__ == "__main__":
    # Module config (attention_dropout=0.0 -> dropout is identity)
    num_attention_heads = 4
    kv_channels = 32            # projection = 4 * 32 = 128 (lane aligned)
    norm = math.sqrt(kv_channels)

    def check(out, q, k, v, mask):
        ref_m = _reference(q, k, v, mask, norm, compute_dtype=jnp.bfloat16)
        ref_x = _reference(q, k, v, mask, norm)
        assert out.shape == ref_x.shape
        # Tight check vs the precision-matched (bf16 operand + bf16 exp) ref.
        assert jnp.allclose(out, ref_m, atol=2e-2, rtol=2e-2), (
            float(jnp.max(jnp.abs(out - ref_m))))
        # Loose check vs the exact f32 module semantics.
        assert jnp.allclose(out, ref_x, atol=1.5e-1, rtol=1.5e-1), (
            float(jnp.max(jnp.abs(out - ref_x))))

    rng = jax.random.PRNGKey(0)

    # Case 1: small single-tile case, padding-style mask broadcast over heads.
    sq, sk, b = 8, 8, 2
    kq, kk, kv_, km, rng = jax.random.split(rng, 5)
    q1 = jax.random.normal(kq, (sq, b, num_attention_heads, kv_channels), jnp.float32)
    k1 = jax.random.normal(kk, (sk, b, num_attention_heads, kv_channels), jnp.float32)
    v1 = jax.random.normal(kv_, (sk, b, num_attention_heads, kv_channels), jnp.float32)
    m1 = jax.random.bernoulli(km, 0.2, (b, 1, sq, sk))

    o1 = dot_product_attention(q1, k1, v1, m1, kv_channels=kv_channels,
                               num_attention_heads=num_attention_heads)
    o1 = jax.block_until_ready(o1)
    check(o1, q1, k1, v1, m1)

    # Case 2: no mask (no scalar prefetch / skip-table path).
    o2 = dot_product_attention(q1, k1, v1, None, kv_channels=kv_channels,
                               num_attention_heads=num_attention_heads)
    o2 = jax.block_until_ready(o2)
    check(o2, q1, k1, v1, None)

    # Case 3: multi-kv-tile case — exercises online-softmax accumulation,
    # the block-skip table and K/V streaming along the "arbitrary" axis.
    sq3, sk3, b3 = 16, 256, 2
    kq, kk, kv_, km, rng = jax.random.split(rng, 5)
    q3 = jax.random.normal(kq, (sq3, b3, num_attention_heads, kv_channels), jnp.float32)
    k3 = jax.random.normal(kk, (sk3, b3, num_attention_heads, kv_channels), jnp.float32)
    v3 = jax.random.normal(kv_, (sk3, b3, num_attention_heads, kv_channels), jnp.float32)
    m3 = jax.random.bernoulli(km, 0.2, (b3, 1, sq3, sk3))
    o3 = dot_product_attention(q3, k3, v3, m3, kv_channels=kv_channels,
                               num_attention_heads=num_attention_heads,
                               kv_block=128)
    o3 = jax.block_until_ready(o3)
    check(o3, q3, k3, v3, m3)

    print("KERNEL_OK")
</pallas_src>

<mosaic_0001>
module attributes {stable_mosaic.version = 11 : i64} {
  func.func @kernel(%arg0: i32, %arg1: i32, %arg2: i32, %arg3: i32, %arg4: memref<2xi32, #tpu.memory_space<smem>>, %arg5: memref<1x4x8x32xbf16, #tpu.memory_space<vmem>>, %arg6: memref<1x4x32x8xbf16, #tpu.memory_space<vmem>>, %arg7: memref<1x4x8x32xbf16, #tpu.memory_space<vmem>>, %arg8: memref<1x1x8x8xi8, #tpu.memory_space<vmem>>, %arg9: memref<8x128xf32, #tpu.memory_space<vmem>>, %arg10: memref<4x8x1xf32, #tpu.memory_space<vmem>>, %arg11: memref<4x8x1xf32, #tpu.memory_space<vmem>>, %arg12: memref<4x8x32xf32, #tpu.memory_space<vmem>>) attributes {dimension_semantics = [#tpu.dimension_semantics<parallel>, #tpu.dimension_semantics<parallel>, #tpu.dimension_semantics<parallel>, #tpu.dimension_semantics<arbitrary>], iteration_bounds = array<i64: 2, 1, 1, 1>, scalar_prefetch = 1 : i64, scratch_operands = 3 : i64, tpu.core_type = #tpu.core_type<tc>, window_params = [{transform_indices = @transform_0, window_bounds = array<i64: 1, 4, 8, 32>}, {transform_indices = @transform_1, window_bounds = array<i64: 1, 4, 32, 8>}, {transform_indices = @transform_2, window_bounds = array<i64: 1, 4, 8, 32>}, {transform_indices = @transform_3, window_bounds = array<i64: 1, 1, 8, 8>}, {transform_indices = @transform_4, window_bounds = array<i64: 8, 128>}]} {
    %c0_i32 = arith.constant 0 : i32
    %0 = arith.cmpi eq, %arg3, %c0_i32 : i32
    %1 = arith.extui %0 : i1 to i32
    %c0_i32_0 = arith.constant 0 : i32
    %2 = arith.cmpi ne, %1, %c0_i32_0 : i32
    scf.if %2 {
      %cst = arith.constant -1.000000e+30 : f32
      %17 = vector.broadcast %cst : f32 to vector<4x8x1xf32>
      %c0 = arith.constant 0 : index
      %c0_8 = arith.constant 0 : index
      %c0_9 = arith.constant 0 : index
      %18 = vector.load %arg10[%c0, %c0_8, %c0_9] : memref<4x8x1xf32, #tpu.memory_space<vmem>>, vector<4x8x1xf32>
      tpu.vector_store %arg10[%c0, %c0_8, %c0_9], %17 {strides = array<i32>} : memref<4x8x1xf32, #tpu.memory_space<vmem>>, vector<4x8x1xf32>,
      %cst_10 = arith.constant 0.000000e+00 : f32
      %19 = vector.broadcast %cst_10 : f32 to vector<4x8x1xf32>
      %c0_11 = arith.constant 0 : index
      %c0_12 = arith.constant 0 : index
      %c0_13 = arith.constant 0 : index
      %20 = vector.load %arg11[%c0_11, %c0_12, %c0_13] : memref<4x8x1xf32, #tpu.memory_space<vmem>>, vector<4x8x1xf32>
      tpu.vector_store %arg11[%c0_11, %c0_12, %c0_13], %19 {strides = array<i32>} : memref<4x8x1xf32, #tpu.memory_space<vmem>>, vector<4x8x1xf32>,
      %cst_14 = arith.constant 0.000000e+00 : f32
      %21 = vector.broadcast %cst_14 : f32 to vector<4x8x32xf32>
      %c0_15 = arith.constant 0 : index
      %c0_16 = arith.constant 0 : index
      %c0_17 = arith.constant 0 : index
      %22 = vector.load %arg12[%c0_15, %c0_16, %c0_17] : memref<4x8x32xf32, #tpu.memory_space<vmem>>, vector<4x8x32xf32>
      tpu.vector_store %arg12[%c0_15, %c0_16, %c0_17], %21 {strides = array<i32>} : memref<4x8x32xf32, #tpu.memory_space<vmem>>, vector<4x8x32xf32>,
    } else {
    }
    %c1_i32 = arith.constant 1 : i32
    %3 = arith.muli %arg0, %c1_i32 : i32
    %c0_i32_1 = arith.constant 0 : i32
    %4 = arith.addi %3, %c0_i32_1 : i32
    %c1_i32_2 = arith.constant 1 : i32
    %5 = arith.muli %4, %c1_i32_2 : i32
    %6 = arith.addi %5, %arg2 : i32
    %c1_i32_3 = arith.constant 1 : i32
    %7 = arith.muli %6, %c1_i32_3 : i32
    %8 = arith.addi %7, %arg3 : i32
    %9 = arith.index_cast %8 : i32 to index
    %10 = memref.load %arg4[%9] : memref<2xi32, #tpu.memory_space<smem>>
    %c0_i32_4 = arith.constant 0 : i32
    %11 = arith.cmpi ne, %10, %c0_i32_4 : i32
    %12 = arith.extui %11 : i1 to i32
    %c0_i32_5 = arith.constant 0 : i32
    %13 = arith.cmpi ne, %12, %c0_i32_5 : i32
    scf.if %13 {
      %c0 = arith.constant 0 : index
      %c0_8 = arith.constant 0 : index
      %c0_9 = arith.constant 0 : index
      %c0_10 = arith.constant 0 : index
      %17 = vector.load %arg5[%c0, %c0_8, %c0_9, %c0_10] : memref<1x4x8x32xbf16, #tpu.memory_space<vmem>>, vector<1x4x8x32xbf16>
      %18 = vector.shape_cast %17 : vector<1x4x8x32xbf16> to vector<4x8x32xbf16>
      %c0_11 = arith.constant 0 : index
      %c0_12 = arith.constant 0 : index
      %c0_13 = arith.constant 0 : index
      %c0_14 = arith.constant 0 : index
      %19 = vector.load %arg6[%c0_11, %c0_12, %c0_13, %c0_14] : memref<1x4x32x8xbf16, #tpu.memory_space<vmem>>, vector<1x4x32x8xbf16>
      %20 = vector.shape_cast %19 : vector<1x4x32x8xbf16> to vector<4x32x8xbf16>
      %c0_15 = arith.constant 0 : index
      %c0_16 = arith.constant 0 : index
      %c0_17 = arith.constant 0 : index
      %c0_18 = arith.constant 0 : index
      %21 = vector.load %arg7[%c0_15, %c0_16, %c0_17, %c0_18] : memref<1x4x8x32xbf16, #tpu.memory_space<vmem>>, vector<1x4x8x32xbf16>
      %22 = vector.shape_cast %21 : vector<1x4x8x32xbf16> to vector<4x8x32xbf16>
      "tpu.trace_start"() <{level = 10 : i32, message = "hqd,hdk->hqk"}> : () -> ()
      %cst = arith.constant dense<0.000000e+00> : vector<4x8x8xf32>
      %23 = tpu.matmul %18, %20, %cst {dimension_numbers = #tpu.dot_dimension_numbers<[2], [1], [1], [2], [0, 0, 0, 1, 1, 2], [0], [0]>} : vector<4x8x32xbf16>, vector<4x32x8xbf16>, vector<4x8x8xf32> -> vector<4x8x8xf32>
      "tpu.trace_stop"() : () -> ()
      %c0_19 = arith.constant 0 : index
      %c0_20 = arith.constant 0 : index
      %c0_21 = arith.constant 0 : index
      %c0_22 = arith.constant 0 : index
      %24 = vector.load %arg8[%c0_19, %c0_20, %c0_21, %c0_22] : memref<1x1x8x8xi8, #tpu.memory_space<vmem>>, vector<1x1x8x8xi8>
      %25 = vector.shape_cast %24 : vector<1x1x8x8xi8> to vector<1x8x8xi8>
      %c0_i8 = arith.constant 0 : i8
      %26 = vector.broadcast %c0_i8 : i8 to vector<1x8x8xi8>
      %27 = arith.cmpi ne, %25, %26 : vector<1x8x8xi8>
      %cst_23 = arith.constant -1.000000e+04 : f32
      %28 = vector.shape_cast %27 : vector<1x8x8xi1> to vector<1x8x8xi1>
      %29 = vector.broadcast %28 : vector<1x8x8xi1> to vector<4x8x8xi1>
      %30 = vector.broadcast %cst_23 : f32 to vector<4x8x8xf32>
      %31 = arith.select %29, %30, %23 : vector<4x8x8xi1>, vector<4x8x8xf32>
      %c0_24 = arith.constant 0 : index
      %c0_25 = arith.constant 0 : index
      %c0_26 = arith.constant 0 : index
      %32 = vector.load %arg10[%c0_24, %c0_25, %c0_26] : memref<4x8x1xf32, #tpu.memory_space<vmem>>, vector<4x8x1xf32>
      %cst_27 = arith.constant dense<0xFF800000> : vector<4x8xf32>
      %33 = vector.multi_reduction <maximumf>, %31, %cst_27 [2] : vector<4x8x8xf32> to vector<4x8xf32>
      %34 = vector.shape_cast %33 : vector<4x8xf32> to vector<4x8x1xf32>
      %35 = arith.maximumf %32, %34 : vector<4x8x1xf32>
      %36 = arith.subf %32, %35 : vector<4x8x1xf32>
      %37 = math.exp %36 : vector<4x8x1xf32>
      %38 = vector.broadcast %35 : vector<4x8x1xf32> to vector<4x8x8xf32>
      %39 = arith.subf %31, %38 : vector<4x8x8xf32>
      %40 = arith.truncf %39 : vector<4x8x8xf32> to vector<4x8x8xbf16>
      %41 = math.exp %40 : vector<4x8x8xbf16>
      %c0_28 = arith.constant 0 : index
      %c0_29 = arith.constant 0 : index
      %c0_30 = arith.constant 0 : index
      %42 = vector.load %arg11[%c0_28, %c0_29, %c0_30] : memref<4x8x1xf32, #tpu.memory_space<vmem>>, vector<4x8x1xf32>
      %43 = arith.mulf %37, %42 : vector<4x8x1xf32>
      %44 = arith.extf %41 : vector<4x8x8xbf16> to vector<4x8x8xf32>
      %cst_31 = arith.constant dense<0.000000e+00> : vector<4x8xf32>
      %45 = vector.multi_reduction <add>, %44, %cst_31 [2] : vector<4x8x8xf32> to vector<4x8xf32>
      %46 = vector.shape_cast %45 : vector<4x8xf32> to vector<4x8x1xf32>
      %47 = arith.addf %43, %46 : vector<4x8x1xf32>
      %c0_32 = arith.constant 0 : index
      %c0_33 = arith.constant 0 : index
      %c0_34 = arith.constant 0 : index
      %48 = vector.load %arg11[%c0_32, %c0_33, %c0_34] : memref<4x8x1xf32, #tpu.memory_space<vmem>>, vector<4x8x1xf32>
      tpu.vector_store %arg11[%c0_32, %c0_33, %c0_34], %47 {strides = array<i32>} : memref<4x8x1xf32, #tpu.memory_space<vmem>>, vector<4x8x1xf32>,
      %c0_35 = arith.constant 0 : index
      %c0_36 = arith.constant 0 : index
      %c0_37 = arith.constant 0 : index
      %49 = vector.load %arg12[%c0_35, %c0_36, %c0_37] : memref<4x8x32xf32, #tpu.memory_space<vmem>>, vector<4x8x32xf32>
      %50 = vector.broadcast %37 : vector<4x8x1xf32> to vector<4x8x32xf32>
      %51 = arith.mulf %50, %49 : vector<4x8x32xf32>
      "tpu.trace_start"() <{level = 10 : i32, message = "hqk,hkd->hqd"}> : () -> ()
      %cst_38 = arith.constant dense<0.000000e+00> : vector<4x8x32xf32>
      %52 = tpu.matmul %41, %22, %cst_38 {dimension_numbers = #tpu.dot_dimension_numbers<[2], [1], [1], [2], [0, 0, 0, 1, 1, 2], [0], [0]>} : vector<4x8x8xbf16>, vector<4x8x32xbf16>, vector<4x8x32xf32> -> vector<4x8x32xf32>
      "tpu.trace_stop"() : () -> ()
      %53 = arith.addf %51, %52 : vector<4x8x32xf32>
      %c0_39 = arith.constant 0 : index
      %c0_40 = arith.constant 0 : index
      %c0_41 = arith.constant 0 : index
      %54 = vector.load %arg12[%c0_39, %c0_40, %c0_41] : memref<4x8x32xf32, #tpu.memory_space<vmem>>, vector<4x8x32xf32>
      tpu.vector_store %arg12[%c0_39, %c0_40, %c0_41], %53 {strides = array<i32>} : memref<4x8x32xf32, #tpu.memory_space<vmem>>, vector<4x8x32xf32>,
      %c0_42 = arith.constant 0 : index
      %c0_43 = arith.constant 0 : index
      %c0_44 = arith.constant 0 : index
      %55 = vector.load %arg10[%c0_42, %c0_43, %c0_44] : memref<4x8x1xf32, #tpu.memory_space<vmem>>, vector<4x8x1xf32>
      tpu.vector_store %arg10[%c0_42, %c0_43, %c0_44], %35 {strides = array<i32>} : memref<4x8x1xf32, #tpu.memory_space<vmem>>, vector<4x8x1xf32>,
    } else {
    }
    %c0_i32_6 = arith.constant 0 : i32
    %14 = arith.cmpi eq, %arg3, %c0_i32_6 : i32
    %15 = arith.extui %14 : i1 to i32
    %c0_i32_7 = arith.constant 0 : i32
    %16 = arith.cmpi ne, %15, %c0_i32_7 : i32
    scf.if %16 {
      %c0 = arith.constant 0 : index
      %c0_8 = arith.constant 0 : index
      %c0_9 = arith.constant 0 : index
      %17 = vector.load %arg11[%c0, %c0_8, %c0_9] : memref<4x8x1xf32, #tpu.memory_space<vmem>>, vector<4x8x1xf32>
      %18 = tpu.reciprocal %17 {approx = true} : vector<4x8x1xf32> -> vector<4x8x1xf32>
      %c0_10 = arith.constant 0 : index
      %c0_11 = arith.constant 0 : index
      %c0_12 = arith.constant 0 : index
      %19 = vector.load %arg12[%c0_10, %c0_11, %c0_12] : memref<4x8x32xf32, #tpu.memory_space<vmem>>, vector<4x8x32xf32>
      %20 = vector.broadcast %18 : vector<4x8x1xf32> to vector<4x8x32xf32>
      %21 = arith.mulf %19, %20 : vector<4x8x32xf32>
      %22 = vector.extract_strided_slice %21 {offsets = [0, 0, 0], sizes = [1, 8, 32], strides = [1, 1, 1]} : vector<4x8x32xf32> to vector<1x8x32xf32>
      %23 = vector.shape_cast %22 : vector<1x8x32xf32> to vector<8x32xf32>
      %c0_13 = arith.constant 0 : index
      %c0_14 = arith.constant 0 : index
      %24 = vector.load %arg9[%c0_13, %c0_14] : memref<8x128xf32, #tpu.memory_space<vmem>>, vector<8x32xf32>
      tpu.vector_store %arg9[%c0_13, %c0_14], %23 {strides = array<i32>} : memref<8x128xf32, #tpu.memory_space<vmem>>, vector<8x32xf32>,
      %25 = vector.extract_strided_slice %21 {offsets = [1, 0, 0], sizes = [1, 8, 32], strides = [1, 1, 1]} : vector<4x8x32xf32> to vector<1x8x32xf32>
      %26 = vector.shape_cast %25 : vector<1x8x32xf32> to vector<8x32xf32>
      %c0_15 = arith.constant 0 : index
      %c32 = arith.constant 32 : index
      %27 = vector.load %arg9[%c0_15, %c32] : memref<8x128xf32, #tpu.memory_space<vmem>>, vector<8x32xf32>
      tpu.vector_store %arg9[%c0_15, %c32], %26 {strides = array<i32>} : memref<8x128xf32, #tpu.memory_space<vmem>>, vector<8x32xf32>,
      %28 = vector.extract_strided_slice %21 {offsets = [2, 0, 0], sizes = [1, 8, 32], strides = [1, 1, 1]} : vector<4x8x32xf32> to vector<1x8x32xf32>
      %29 = vector.shape_cast %28 : vector<1x8x32xf32> to vector<8x32xf32>
      %c0_16 = arith.constant 0 : index
      %c64 = arith.constant 64 : index
      %30 = vector.load %arg9[%c0_16, %c64] : memref<8x128xf32, #tpu.memory_space<vmem>>, vector<8x32xf32>
      tpu.vector_store %arg9[%c0_16, %c64], %29 {strides = array<i32>} : memref<8x128xf32, #tpu.memory_space<vmem>>, vector<8x32xf32>,
      %31 = vector.extract_strided_slice %21 {offsets = [3, 0, 0], sizes = [1, 8, 32], strides = [1, 1, 1]} : vector<4x8x32xf32> to vector<1x8x32xf32>
      %32 = vector.shape_cast %31 : vector<1x8x32xf32> to vector<8x32xf32>
      %c0_17 = arith.constant 0 : index
      %c96 = arith.constant 96 : index
      %33 = vector.load %arg9[%c0_17, %c96] : memref<8x128xf32, #tpu.memory_space<vmem>>, vector<8x32xf32>
      tpu.vector_store %arg9[%c0_17, %c96], %32 {strides = array<i32>} : memref<8x128xf32, #tpu.memory_space<vmem>>, vector<8x32xf32>,
    } else {
    }
    return
  }
  func.func @transform_0(%arg0: i32, %arg1: i32, %arg2: i32, %arg3: i32, %arg4: memref<2xi32, #tpu.memory_space<smem>>) -> (i32, i32, i32, i32) {
    %c0_i32 = arith.constant 0 : i32
    %c0_i32_0 = arith.constant 0 : i32
    return %arg0, %arg1, %arg2, %c0_i32 : i32, i32, i32, i32
  }
  func.func @transform_1(%arg0: i32, %arg1: i32, %arg2: i32, %arg3: i32, %arg4: memref<2xi32, #tpu.memory_space<smem>>) -> (i32, i32, i32, i32) {
    %c0_i32 = arith.constant 0 : i32
    %c0_i32_0 = arith.constant 0 : i32
    return %arg0, %arg1, %c0_i32, %arg3 : i32, i32, i32, i32
  }
  func.func @transform_2(%arg0: i32, %arg1: i32, %arg2: i32, %arg3: i32, %arg4: memref<2xi32, #tpu.memory_space<smem>>) -> (i32, i32, i32, i32) {
    %c0_i32 = arith.constant 0 : i32
    %c0_i32_0 = arith.constant 0 : i32
    return %arg0, %arg1, %arg3, %c0_i32 : i32, i32, i32, i32
  }
  func.func @transform_3(%arg0: i32, %arg1: i32, %arg2: i32, %arg3: i32, %arg4: memref<2xi32, #tpu.memory_space<smem>>) -> (i32, i32, i32, i32) {
    %c0_i32 = arith.constant 0 : i32
    %c0_i32_0 = arith.constant 0 : i32
    return %arg0, %c0_i32, %arg2, %arg3 : i32, i32, i32, i32
  }
  func.func @transform_4(%arg0: i32, %arg1: i32, %arg2: i32, %arg3: i32, %arg4: memref<2xi32, #tpu.memory_space<smem>>) -> (i32, i32) {
    %c1_i32 = arith.constant 1 : i32
    %0 = arith.muli %arg0, %c1_i32 : i32
    %1 = arith.addi %0, %arg1 : i32
    %c0_i32 = arith.constant 0 : i32
    return %arg2, %1 : i32, i32
  }
}

</mosaic_0001>

<llo_original>
// kernel: tpu_custom_call.1
$region0: #{tpu_custom_call.1}
  #allocation0 [shape = 'u32[]', space=smem, size = 0x4, offset = 0x4, fixed_abs, tag = 'smem constant byte address 0x4 - core index']
  #allocation1 [shape = 'u32[144,128]{1,0:T(1,128)}', space=vmem, size = 0x12000, scoped, tag = 'internal scratch']
  #allocation2 [shape = 'f32[4,8,1]{2,1,0:T(8,128)}', space=vmem, size = 0x4000, scoped, tag = 'scratch operand']
  #allocation3 [shape = 'f32[4,8,1]{2,1,0:T(8,128)}', space=vmem, size = 0x4000, scoped, tag = 'scratch operand']
  #allocation4 [shape = 'f32[4,8,32]{2,1,0:T(8,128)}', space=vmem, size = 0x4000, scoped, tag = 'scratch operand']
  #allocation5 [shape = 's32[1]{0}', space=sflag, size = 0x4, scoped, tag = 'scoped memory for tpu_custom_call.1']
  #allocation6 [shape = 'u8[512]{0}', space=smem, size = 0x200, scoped, tag = 'prefetched SMEM operand 0']
  %s0 = inlined_call_operand.vmem [shape: s32[2], index: 0, kind: input, shape index: {}]
  %s1 = inlined_call_operand.vmem [shape: bf16[2,4,8,32], index: 1, kind: input, shape index: {}]
  %s2 = inlined_call_operand.vmem [shape: bf16[2,4,32,8], index: 2, kind: input, shape index: {}]
  %s3 = inlined_call_operand.vmem [shape: bf16[2,4,8,32], index: 3, kind: input, shape index: {}]
  %s4 = inlined_call_operand.vmem [shape: s8[2,1,8,8], index: 4, kind: input, shape index: {}]
  %s5 = inlined_call_operand.hbm [shape: f32[8,256], index: 5, kind: output, shape index: {}]
  %s6 = sld [smem:[#allocation0]]
  $region61: #{tpu_custom_call.1} parent=0
    _
  %s8 = ssub.s32 1, %s6
  %s9 = scalar_select 0, %s8, %s6
  %s10 = sshll.u32 %s0, 4
  %s11 = int_to_ptr.vmem [resolvable:$true] %s10
  %13 = dma.vmem_to_smem %s11, 16, [#allocation6], [#allocation5]
  %14 = dma.done [#allocation5], 16
  %15 = sfence
  $region1: #{tpu_custom_call.1} parent=0
    #allocation7 [shape = 'u8[8192]{0}', space=vmem, size = 0x2000, scoped, tag = 'output window, operand 0']
    #allocation8 [shape = 's32[2]{0}', space=sflag, size = 0x8, scoped, tag = 'scoped memory for tpu_custom_call.1']
    %16 = vsyncpa [#allocation8], 0
    %s17 = scalar_lea.sflag [#allocation8], 1
    %18 = vsyncpa %s17, 0
    loop: start=0, step=1, limit=4
    $region2: #{tpu_custom_call.1} parent=1 // loop_pre_header
      _
    $region3: #{tpu_custom_call.1} parent=1 // loop_header
      %s20 = sphi 0, %s24
      %p21 = scmp.ge.s32.totalorder %s20, 4
      %s27 = sphi 0, %s53
      %s28 = sphi 0, %s49
      %s29 = sphi 0, %s45
      %s30 = sphi 0, %s41
      %s31 = sphi 0, %s27
      %s32 = sphi 0, %s28
      %s33 = sphi 0, %s29
      %s34 = sphi 0, %s30
      %s35 = sphi 0, %s31
      %s36 = sphi 0, %s32
      %s37 = sphi 0, %s33
      %s38 = sphi 0, %s34
      %s60 = sphi 0, %s62
      %s63 = sphi 0, %s60
      %s64 = sphi 0, %s63
      %s80 = sphi 0, %s64
      %s90 = sphi 0, %s92
      %s93 = sphi 0, %s90
      %s94 = sphi 0, %s93
      %s110 = sphi 0, %s94
      %s120 = sphi 0, %s122
      %s123 = sphi 0, %s120
      %s124 = sphi 0, %s123
      %s140 = sphi 0, %s124
      %s150 = sphi 0, %s152
      %s153 = sphi 0, %s150
      %s154 = sphi 0, %s153
      %s170 = sphi 0, %s154
      %s180 = sphi 0, %s182
      %s183 = sphi 0, %s180
      %s184 = sphi 0, %s183
      %s200 = sphi 0, %s184
    $region4: #{tpu_custom_call.1} parent=1 // loop_header_branch
      %23 = sbr.rel (%p21) target = $region8
    $region5: #{tpu_custom_call.1} parent=1 // loop_body
      %s25 = ssub.s32 %s20, 1
      %s26 = ssub.s32 %s20, 2
      %s39 = sadd.s32 1, %s30
      %p40 = scmp.ge.s32.totalorder %s39, 1
      %s41 = scalar_select %p40, 0, %s39
      %s42 = sadd.s32 1, %s29
      %s43 = scalar_select %p40, %s42, %s29
      %p44 = scmp.ge.s32.totalorder %s43, 1
      %s45 = scalar_select %p44, 0, %s43
      %s46 = sadd.s32 1, %s28
      %s47 = scalar_select %p44, %s46, %s28
      %p48 = scmp.ge.s32.totalorder %s47, 1
      %s49 = scalar_select %p48, 0, %s47
      %s50 = sadd.s32 1, %s27
      %s51 = scalar_select %p48, %s50, %s27
      %p52 = scmp.ge.s32.totalorder %s51, 2
      %s53 = scalar_select %p52, 0, %s51
      %s54 = ssub.s32 %s27, %s53
      %s55 = ssub.s32 %s28, %s49
      %s56 = sor.u32 %s54, %s55
      %s57 = ssub.s32 %s29, %s45
      %s58 = sor.u32 %s56, %s57
      %p59 = scmp.eq.s32.totalorder %s58, 0
      %s61 = sadd.s32 %s60, 1
      %s62 = scalar_select %p59, %s60, %s61
      %p65 = pneg %p59
      %p66 = scmp.eq.s32.totalorder %s20, 1
      %p67 = por %p65, %p66
      %p68 = scmp.ne.s32.totalorder %s60, %s63
      %p69 = scmp.eq.s32.totalorder %s20, 0
      %p70 = por %p68, %p69
      %p71 = scmp.ne.s32.totalorder %s60, %s63
      %p72 = scmp.eq.s32.totalorder %s25, 1
      %p73 = por %p71, %p72
      %p74 = scmp.ne.s32.totalorder %s63, %s64
      %p75 = scmp.eq.s32.totalorder %s25, 0
      %p76 = por %p74, %p75
      %p77 = scmp.ne.s32.totalorder %s63, %s64
      %p78 = scmp.eq.s32.totalorder %s26, 1
      %p79 = por %p77, %p78
      %p81 = scmp.ne.s32.totalorder %s64, %s80
      %p82 = scmp.eq.s32.totalorder %s26, 0
      %p83 = por %p81, %p82
      %s84 = ssub.s32 %s27, %s53
      %s85 = ssub.s32 %s28, %s49
      %s86 = sor.u32 %s84, %s85
      %s87 = ssub.s32 %s30, %s41
      %s88 = sor.u32 %s86, %s87
      %p89 = scmp.eq.s32.totalorder %s88, 0
      %s91 = sadd.s32 %s90, 1
      %s92 = scalar_select %p89, %s90, %s91
      %p95 = pneg %p89
      %p96 = scmp.eq.s32.totalorder %s20, 1
      %p97 = por %p95, %p96
      %p98 = scmp.ne.s32.totalorder %s90, %s93
      %p99 = scmp.eq.s32.totalorder %s20, 0
      %p100 = por %p98, %p99
      %p101 = scmp.ne.s32.totalorder %s90, %s93
      %p102 = scmp.eq.s32.totalorder %s25, 1
      %p103 = por %p101, %p102
      %p104 = scmp.ne.s32.totalorder %s93, %s94
      %p105 = scmp.eq.s32.totalorder %s25, 0
      %p106 = por %p104, %p105
      %p107 = scmp.ne.s32.totalorder %s93, %s94
      %p108 = scmp.eq.s32.totalorder %s26, 1
      %p109 = por %p107, %p108
      %p111 = scmp.ne.s32.totalorder %s94, %s110
      %p112 = scmp.eq.s32.totalorder %s26, 0
      %p113 = por %p111, %p112
      %s114 = ssub.s32 %s27, %s53
      %s115 = ssub.s32 %s28, %s49
      %s116 = sor.u32 %s114, %s115
      %s117 = ssub.s32 %s30, %s41
      %s118 = sor.u32 %s116, %s117
      %p119 = scmp.eq.s32.totalorder %s118, 0
      %s121 = sadd.s32 %s120, 1
      %s122 = scalar_select %p119, %s120, %s121
      %p125 = pneg %p119
      %p126 = scmp.eq.s32.totalorder %s20, 1
      %p127 = por %p125, %p126
      %p128 = scmp.ne.s32.totalorder %s120, %s123
      %p129 = scmp.eq.s32.totalorder %s20, 0
      %p130 = por %p128, %p129
      %p131 = scmp.ne.s32.totalorder %s120, %s123
      %p132 = scmp.eq.s32.totalorder %s25, 1
      %p133 = por %p131, %p132
      %p134 = scmp.ne.s32.totalorder %s123, %s124
      %p135 = scmp.eq.s32.totalorder %s25, 0
      %p136 = por %p134, %p135
      %p137 = scmp.ne.s32.totalorder %s123, %s124
      %p138 = scmp.eq.s32.totalorder %s26, 1
      %p139 = por %p137, %p138
      %p141 = scmp.ne.s32.totalorder %s124, %s140
      %p142 = scmp.eq.s32.totalorder %s26, 0
      %p143 = por %p141, %p142
      %s144 = ssub.s32 %s27, %s53
      %s145 = ssub.s32 %s29, %s45
      %s146 = sor.u32 %s144, %s145
      %s147 = ssub.s32 %s30, %s41
      %s148 = sor.u32 %s146, %s147
      %p149 = scmp.eq.s32.totalorder %s148, 0
      %s151 = sadd.s32 %s150, 1
      %s152 = scalar_select %p149, %s150, %s151
      %p155 = pneg %p149
      %p156 = scmp.eq.s32.totalorder %s20, 1
      %p157 = por %p155, %p156
      %p158 = scmp.ne.s32.totalorder %s150, %s153
      %p159 = scmp.eq.s32.totalorder %s20, 0
      %p160 = por %p158, %p159
      %p161 = scmp.ne.s32.totalorder %s150, %s153
      %p162 = scmp.eq.s32.totalorder %s25, 1
      %p163 = por %p161, %p162
      %p164 = scmp.ne.s32.totalorder %s153, %s154
      %p165 = scmp.eq.s32.totalorder %s25, 0
      %p166 = por %p164, %p165
      %p167 = scmp.ne.s32.totalorder %s153, %s154
      %p168 = scmp.eq.s32.totalorder %s26, 1
      %p169 = por %p167, %p168
      %p171 = scmp.ne.s32.totalorder %s154, %s170
      %p172 = scmp.eq.s32.totalorder %s26, 0
      %p173 = por %p171, %p172
      %s174 = sadd.s32 %s27, %s28
      %s175 = sadd.s32 %s53, %s49
      %s176 = ssub.s32 %s29, %s45
      %s177 = ssub.s32 %s174, %s175
      %s178 = sor.u32 %s176, %s177
      %p179 = scmp.eq.s32.totalorder %s178, 0
      %s181 = sadd.s32 %s180, 1
      %s182 = scalar_select %p179, %s180, %s181
      %p185 = pneg %p179
      %p186 = scmp.eq.s32.totalorder %s20, 1
      %p187 = por %p185, %p186
      %p188 = scmp.ne.s32.totalorder %s180, %s183
      %p189 = scmp.eq.s32.totalorder %s20, 0
      %p190 = por %p188, %p189
      %p191 = scmp.ne.s32.totalorder %s180, %s183
      %p192 = scmp.eq.s32.totalorder %s25, 1
      %p193 = por %p191, %p192
      %p194 = scmp.ne.s32.totalorder %s183, %s184
      %p195 = scmp.eq.s32.totalorder %s25, 0
      %p196 = por %p194, %p195
      %p197 = scmp.ne.s32.totalorder %s183, %s184
      %p198 = scmp.eq.s32.totalorder %s26, 1
      %p199 = por %p197, %p198
      %p201 = scmp.ne.s32.totalorder %s184, %s200
      %p202 = scmp.eq.s32.totalorder %s26, 0
      %p203 = por %p201, %p202
      %p204 = scmp.le.s32.totalorder 1, %s20
      %p205 = scmp.lt.s32.totalorder %s20, 3
      %p206 = pnand %p204, %p205
      %p207 = pneg %p206
      // Predicated region
      $region9: #{tpu_custom_call.1} parent=5 // pred_check
        _
      $region10: #{tpu_custom_call.1} parent=5 // pred_check_branch
        %209 = sbr.rel (%p206) target = $region12
      $region11: #{tpu_custom_call.1} parent=5 // pred_region
        %s210 = ssub.s32 %s20, 1
      $region12: #{tpu_custom_call.1} parent=5 // pred_fallthru
        _
      %p211 = scmp.lt.s32.totalorder %s20, 2
      // Predicated region
      $region13: #{tpu_custom_call.1} parent=5 // pred_check
        %p212 = pneg %p211
      $region14: #{tpu_custom_call.1} parent=5 // pred_check_branch
        %214 = sbr.rel (%p212) target = $region16
      $region15: #{tpu_custom_call.1} parent=5 // pred_region
        // Predicated region
        $region17: #{tpu_custom_call.1} parent=15 // pred_check
          %p215 = pneg %p70
        $region18: #{tpu_custom_call.1} parent=15 // pred_check_branch
          %217 = sbr.rel (%p215) target = $region20
        $region19: #{tpu_custom_call.1} parent=15 // pred_region
          %s218 = smul.u32 4, %s28
          %p219 = scmp.lt.s32.totalorder %s27, 1
          %s220 = scalar_select %p219, %s27, 1
          %p221 = scmp.lt.s32.totalorder %s218, 3
          %s222 = scalar_select %p221, %s218, 3
          %p223 = scmp.lt.s32.totalorder %s29, 0
          %s224 = scalar_select %p223, %s29, 0
          %s225 = sadd.s32 %s224, %s222
          %s226 = smul.addr %s220, 4
          %s227 = sadd.s32 %s225, %s226
          %s228 = smul.addr %s227, 4
          %s229 = scalar_lea.vmem %s1, %s228
          %s230 = smul.u32 4, %s28
        $region20: #{tpu_custom_call.1} parent=15 // pred_fallthru
          _
        // Predicated region
        $region21: #{tpu_custom_call.1} parent=15 // pred_check
          %p231 = pneg %p100
        $region22: #{tpu_custom_call.1} parent=15 // pred_check_branch
          %233 = sbr.rel (%p231) target = $region24
        $region23: #{tpu_custom_call.1} parent=15 // pred_region
          %s234 = smul.u32 4, %s28
          %p235 = scmp.lt.s32.totalorder %s27, 1
          %s236 = scalar_select %p235, %s27, 1
          %p237 = scmp.lt.s32.totalorder %s234, 3
          %s238 = scalar_select %p237, %s234, 3
          %p239 = scmp.lt.s32.totalorder %s30, 0
          %s240 = scalar_select %p239, %s30, 0
          %s241 = smul.addr %s238, 4
          %s242 = sadd.s32 %s240, %s241
          %s243 = smul.addr %s236, 16
          %s244 = sadd.s32 %s242, %s243
          %s245 = smul.addr %s244, 4
          %s246 = scalar_lea.vmem %s2, %s245
          %s247 = smul.u32 4, %s28
        $region24: #{tpu_custom_call.1} parent=15 // pred_fallthru
          _
        // Predicated region
        $region25: #{tpu_custom_call.1} parent=15 // pred_check
          %p248 = pneg %p130
        $region26: #{tpu_custom_call.1} parent=15 // pred_check_branch
          %250 = sbr.rel (%p248) target = $region28
        $region27: #{tpu_custom_call.1} parent=15 // pred_region
          %s251 = smul.u32 4, %s28
          %p252 = scmp.lt.s32.totalorder %s27, 1
          %s253 = scalar_select %p252, %s27, 1
          %p254 = scmp.lt.s32.totalorder %s251, 3
          %s255 = scalar_select %p254, %s251, 3
          %p256 = scmp.lt.s32.totalorder %s30, 0
          %s257 = scalar_select %p256, %s30, 0
          %s258 = sadd.s32 %s257, %s255
          %s259 = smul.addr %s253, 4
          %s260 = sadd.s32 %s258, %s259
          %s261 = smul.addr %s260, 4
          %s262 = scalar_lea.vmem %s3, %s261
          %s263 = smul.u32 4, %s28
        $region28: #{tpu_custom_call.1} parent=15 // pred_fallthru
          _
        // Predicated region
        $region29: #{tpu_custom_call.1} parent=15 // pred_check
          %p264 = pneg %p160
        $region30: #{tpu_custom_call.1} parent=15 // pred_check_branch
          %266 = sbr.rel (%p264) target = $region32
        $region31: #{tpu_custom_call.1} parent=15 // pred_region
          %p267 = scmp.lt.s32.totalorder %s27, 1
          %s268 = scalar_select %p267, %s27, 1
          %p269 = scmp.lt.s32.totalorder %s29, 0
          %s270 = scalar_select %p269, %s29, 0
          %p271 = scmp.lt.s32.totalorder %s30, 0
          %s272 = scalar_select %p271, %s30, 0
          %s273 = sadd.s32 %s272, %s270
          %s274 = sadd.s32 %s273, %s268
          %s275 = smul.addr %s274, 2
          %s276 = scalar_lea.vmem %s4, %s275
        $region32: #{tpu_custom_call.1} parent=15 // pred_fallthru
          _
      $region16: #{tpu_custom_call.1} parent=5 // pred_fallthru
        _
      %p277 = scmp.le.s32.totalorder 1, %s20
      %p278 = scmp.lt.s32.totalorder %s20, 3
      %p279 = pnand %p277, %p278
      %p280 = pneg %p279
      // Predicated region
      $region33: #{tpu_custom_call.1} parent=5 // pred_check
        _
      $region34: #{tpu_custom_call.1} parent=5 // pred_check_branch
        %282 = sbr.rel (%p279) target = $region36
      $region35: #{tpu_custom_call.1} parent=5 // pred_region
        %s283 = ssub.s32 %s20, 1
        %s284 = smul.u32 4, %s32
        %p285 = scmp.lt.s32.totalorder %s31, 1
        %s286 = scalar_select %p285, %s31, 1
        %p287 = scmp.lt.s32.totalorder %s284, 3
        %s288 = scalar_select %p287, %s284, 3
        %p289 = scmp.lt.s32.totalorder %s33, 0
        %s290 = scalar_select %p289, %s33, 0
        %s291 = sadd.s32 %s290, %s288
        %s292 = smul.addr %s286, 4
        %s293 = sadd.s32 %s291, %s292
        %s294 = smul.addr %s293, 4
        %s295 = scalar_lea.vmem %s1, %s294
        %p296 = pneg %p76
        %p297 = pneg %p73
        %s298 = smul.u32 4, %s32
        %p299 = scmp.lt.s32.totalorder %s31, 1
        %s300 = scalar_select %p299, %s31, 1
        %p301 = scmp.lt.s32.totalorder %s298, 3
        %s302 = scalar_select %p301, %s298, 3
        %p303 = scmp.lt.s32.totalorder %s34, 0
        %s304 = scalar_select %p303, %s34, 0
        %s305 = smul.addr %s302, 4
        %s306 = sadd.s32 %s304, %s305
        %s307 = smul.addr %s300, 16
        %s308 = sadd.s32 %s306, %s307
        %s309 = smul.addr %s308, 4
        %s310 = scalar_lea.vmem %s2, %s309
        %p311 = pneg %p106
        %p312 = pneg %p103
        %s313 = smul.u32 4, %s32
        %p314 = scmp.lt.s32.totalorder %s31, 1
        %s315 = scalar_select %p314, %s31, 1
        %p316 = scmp.lt.s32.totalorder %s313, 3
        %s317 = scalar_select %p316, %s313, 3
        %p318 = scmp.lt.s32.totalorder %s34, 0
        %s319 = scalar_select %p318, %s34, 0
        %s320 = sadd.s32 %s319, %s317
        %s321 = smul.addr %s315, 4
        %s322 = sadd.s32 %s320, %s321
        %s323 = smul.addr %s322, 4
        %s324 = scalar_lea.vmem %s3, %s323
        %p325 = pneg %p136
        %p326 = pneg %p133
        %p327 = scmp.lt.s32.totalorder %s31, 1
        %s328 = scalar_select %p327, %s31, 1
        %p329 = scmp.lt.s32.totalorder %s33, 0
        %s330 = scalar_select %p329, %s33, 0
        %p331 = scmp.lt.s32.totalorder %s34, 0
        %s332 = scalar_select %p331, %s34, 0
        %s333 = sadd.s32 %s332, %s330
        %s334 = sadd.s32 %s333, %s328
        %s335 = smul.addr %s334, 2
        %s336 = scalar_lea.vmem %s4, %s335
        %p337 = pneg %p166
        %p338 = pneg %p163
        %p339 = pneg %p196
        %p340 = pneg %p193
        %s341 = sand.u32 %s183, 1
        %s342 = scalar_lea.sflag [#allocation8], %s341
        %s343 = sand.u32 %s183, 1
        %s344 = smul.addr %s343, 8
        %s345 = scalar_lea.vmem [#allocation7], %s344
        %s346 = smul.u32 4, %s32
        %p347 = scmp.lt.s32.totalorder %s31, 1
        %s348 = scalar_select %p347, %s31, 1
        %p349 = scmp.lt.s32.totalorder %s346, 3
        %s350 = scalar_select %p349, %s346, 3
        %p351 = scmp.lt.s32.totalorder %s33, 0
        %s352 = scalar_select %p351, %s33, 0
        %s353 = sadd.s32 %s352, %s350
        %s354 = smul.addr %s348, 4
        %s355 = sadd.s32 %s353, %s354
        %s356 = smul.addr %s355, 4
        %s357 = scalar_lea.vmem %s1, %s356
        %s358 = smul.u32 4, %s32
        %s359 = smul.u32 4, %s32
        %p360 = scmp.lt.s32.totalorder %s31, 1
        %s361 = scalar_select %p360, %s31, 1
        %p362 = scmp.lt.s32.totalorder %s359, 3
        %s363 = scalar_select %p362, %s359, 3
        %p364 = scmp.lt.s32.totalorder %s34, 0
        %s365 = scalar_select %p364, %s34, 0
        %s366 = smul.addr %s363, 4
        %s367 = sadd.s32 %s365, %s366
        %s368 = smul.addr %s361, 16
        %s369 = sadd.s32 %s367, %s368
        %s370 = smul.addr %s369, 4
        %s371 = scalar_lea.vmem %s2, %s370
        %s372 = smul.u32 4, %s32
        %s373 = smul.u32 4, %s32
        %p374 = scmp.lt.s32.totalorder %s31, 1
        %s375 = scalar_select %p374, %s31, 1
        %p376 = scmp.lt.s32.totalorder %s373, 3
        %s377 = scalar_select %p376, %s373, 3
        %p378 = scmp.lt.s32.totalorder %s34, 0
        %s379 = scalar_select %p378, %s34, 0
        %s380 = sadd.s32 %s379, %s377
        %s381 = smul.addr %s375, 4
        %s382 = sadd.s32 %s380, %s381
        %s383 = smul.addr %s382, 4
        %s384 = scalar_lea.vmem %s3, %s383
        %s385 = smul.u32 4, %s32
        %p386 = scmp.lt.s32.totalorder %s31, 1
        %s387 = scalar_select %p386, %s31, 1
        %p388 = scmp.lt.s32.totalorder %s33, 0
        %s389 = scalar_select %p388, %s33, 0
        %p390 = scmp.lt.s32.totalorder %s34, 0
        %s391 = scalar_select %p390, %s34, 0
        %s392 = sadd.s32 %s391, %s389
        %s393 = sadd.s32 %s392, %s387
        %s394 = smul.addr %s393, 2
        %s395 = scalar_lea.vmem %s4, %s394
        %s396 = sadd.s32 %s31, %s32
        %p400 = scmp.eq.s32.totalorder %s34, 0
        // Predicated region
        $region37: #{tpu_custom_call.1} parent=35 // pred_check
          %p401 = pneg %p400
        $region38: #{tpu_custom_call.1} parent=35 // pred_check_branch
          %403 = sbr.rel (%p401) target = $region40
        $region39: #{tpu_custom_call.1} parent=35 // pred_region
          %vm404 = vcmask 7168
          %405 = vst.msk [vmem:[#allocation2] sm:$0xff] %vm404, -1e+30
          %406 = vst.msk [vmem:[#allocation2 + $0x8] sm:$0xff] %vm404, -1e+30
          %407 = vst.msk [vmem:[#allocation2 + $0x10] sm:$0xff] %vm404, -1e+30
          %408 = vst.msk [vmem:[#allocation2 + $0x18] sm:$0xff] %vm404, -1e+30
          %409 = vst.msk [vmem:[#allocation3] sm:$0xff] %vm404, 0.0
          %410 = vst.msk [vmem:[#allocation3 + $0x8] sm:$0xff] %vm404, 0.0
          %411 = vst.msk [vmem:[#allocation3 + $0x10] sm:$0xff] %vm404, 0.0
          %412 = vst.msk [vmem:[#allocation3 + $0x18] sm:$0xff] %vm404, 0.0
          %vm413 = vcmask 261120
          %414 = vst.msk [vmem:[#allocation4] sm:$0xff] %vm413, 0.0
          %415 = vst.msk [vmem:[#allocation4 + $0x8] sm:$0xff] %vm413, 0.0
          %416 = vst.msk [vmem:[#allocation4 + $0x10] sm:$0xff] %vm413, 0.0
          %417 = vst.msk [vmem:[#allocation4 + $0x18] sm:$0xff] %vm413, 0.0
        $region40: #{tpu_custom_call.1} parent=35 // pred_fallthru
          _
        %s418 = sadd.s32 %s31, %s33
        %s419 = sadd.s32 %s418, %s34
        %s420 = sld [smem:[#allocation6 + %s419]]
        %p421 = scmp.ne.s32.totalorder %s420, 0
        // Predicated region
        $region41: #{tpu_custom_call.1} parent=35 // pred_check
          %p422 = pneg %p421
        $region42: #{tpu_custom_call.1} parent=35 // pred_check_branch
          %424 = sbr.rel (%p422) target = $region44
        $region43: #{tpu_custom_call.1} parent=35 // pred_region
          %v425 = vld [vmem:[%s357] sm:$0xf]
          %v426 = vld [vmem:[%s357 + $0x4] sm:$0xf]
          %v427 = vld [vmem:[%s357 + $0x8] sm:$0xf]
          %v428 = vld [vmem:[%s357 + $0xc] sm:$0xf]
          %v429 = vld [vmem:[%s371] sm:$0xf]
          %v430 = vld [vmem:[%s371 + $0x4] sm:$0xf]
          %v431 = vld [vmem:[%s371 + $0x8] sm:$0xf]
          %v432 = vld [vmem:[%s371 + $0xc] sm:$0xf]
          %v433 = vld [vmem:[%s371 + $0x10] sm:$0xf]
          %v434 = vld [vmem:[%s371 + $0x14] sm:$0xf]
          %v435 = vld [vmem:[%s371 + $0x18] sm:$0xf]
          %v436 = vld [vmem:[%s371 + $0x1c] sm:$0xf]
          %v437 = vld [vmem:[%s371 + $0x20] sm:$0xf]
          %v438 = vld [vmem:[%s371 + $0x24] sm:$0xf]
          %v439 = vld [vmem:[%s371 + $0x28] sm:$0xf]
          %v440 = vld [vmem:[%s371 + $0x2c] sm:$0xf]
          %v441 = vld [vmem:[%s371 + $0x30] sm:$0xf]
          %v442 = vld [vmem:[%s371 + $0x34] sm:$0xf]
          %v443 = vld [vmem:[%s371 + $0x38] sm:$0xf]
          %v444 = vld [vmem:[%s371 + $0x3c] sm:$0xf]
          %v445 = vld [vmem:[%s384] sm:$0xf]
          %v446 = vld [vmem:[%s384 + $0x4] sm:$0xf]
          %v447 = vld [vmem:[%s384 + $0x8] sm:$0xf]
          %v448 = vld [vmem:[%s384 + $0xc] sm:$0xf]
          %v453 = vunpack.c.l.b16 %v429
          %v454 = vunpack.c.l.b16 %v430
          %v455 = vunpack.c.l.b16 %v431
          %v456 = vunpack.c.l.b16 %v432
          %v457 = vpack.c.b16 %v454, %v453
          %v458 = vpack.c.b16 %v456, %v455
          %vm461 = vcmask 261120
          %v463 = vsel %vm461, %v425, 0
          %465 = vmatprep.subr.bf16.mxu0 0
          %466 = vmatpush1.bf16.msra.mxu0 %v457
          %467 = vmatprep.subr.bf16.mxu0 0
          %468 = vmatpush1.bf16.msra.mxu0 %v458
          %469 = vmatprep.subr.bf16.mxu0 0
          %470 = vmatpush1.bf16.msra.mxu0 0
          %471 = vmatprep.subr.bf16.mxu0 0
          %472 = vmatpush1.bf16.msra.mxu0 0
          %473 = vmatprep.subr.bf16.mxu0 0
          %474 = vmatpush1.bf16.msra.mxu0 0
          %475 = vmatprep.subr.bf16.mxu0 0
          %476 = vmatpush1.bf16.msra.mxu0 0
          %477 = vmatprep.subr.bf16.mxu0 0
          %478 = vmatpush1.bf16.msra.mxu0 0
          %479 = vmatprep.subr.bf16.mxu0 0
          %480 = vmatpush1.bf16.msra.mxu0 0
          %481 = vmatprep.subr.bf16.mxu0 0
          %482 = vmatpush1.bf16.msra.mxu0 0
          %483 = vmatprep.subr.bf16.mxu0 0
          %484 = vmatpush1.bf16.msra.mxu0 0
          %485 = vmatprep.subr.bf16.mxu0 0
          %486 = vmatpush1.bf16.msra.mxu0 0
          %487 = vmatprep.subr.bf16.mxu0 0
          %488 = vmatpush1.bf16.msra.mxu0 0
          %489 = vmatprep.subr.bf16.mxu0 0
          %490 = vmatpush1.bf16.msra.mxu0 0
          %491 = vmatprep.subr.bf16.mxu0 0
          %492 = vmatpush1.bf16.msra.mxu0 0
          %493 = vmatprep.subr.bf16.mxu0 0
          %494 = vmatpush1.bf16.msra.mxu0 0
          %495 = vmatprep.subr.bf16.mxu0 0
          %496 = vmatpush1.bf16.msra.mxu0 0
          %497 = vmatprep.mubr.bf16.mxu0 0
          %498 = vmatmul.mubr.bf16.gmra.mrb[0].mxu0 %v463
          %v499 = vpop.f32.mrb[0].mxu0
          %v500 = vadd.f32 0.0, %v499
          %v501 = vpop.f32.mrb[0].mxu0
          %v502 = vpop.f32.mrb[0].mxu0
          %v503 = vpop.f32.mrb[0].mxu0
          %504 = vdwg.mxu0
          %v509 = vunpack.c.l.b16 %v433
          %v510 = vunpack.c.l.b16 %v434
          %v511 = vunpack.c.l.b16 %v435
          %v512 = vunpack.c.l.b16 %v436
          %v513 = vpack.c.b16 %v510, %v509
          %v514 = vpack.c.b16 %v512, %v511
          %v518 = vsel %vm461, %v426, 0
          %520 = vmatprep.subr.bf16.mxu0 0
          %521 = vmatpush1.bf16.msra.mxu0 %v513
          %522 = vmatprep.subr.bf16.mxu0 0
          %523 = vmatpush1.bf16.msra.mxu0 %v514
          %524 = vmatprep.subr.bf16.mxu0 0
          %525 = vmatpush1.bf16.msra.mxu0 0
          %526 = vmatprep.subr.bf16.mxu0 0
          %527 = vmatpush1.bf16.msra.mxu0 0
          %528 = vmatprep.subr.bf16.mxu0 0
          %529 = vmatpush1.bf16.msra.mxu0 0
          %530 = vmatprep.subr.bf16.mxu0 0
          %531 = vmatpush1.bf16.msra.mxu0 0
          %532 = vmatprep.subr.bf16.mxu0 0
          %533 = vmatpush1.bf16.msra.mxu0 0
          %534 = vmatprep.subr.bf16.mxu0 0
          %535 = vmatpush1.bf16.msra.mxu0 0
          %536 = vmatprep.subr.bf16.mxu0 0
          %537 = vmatpush1.bf16.msra.mxu0 0
          %538 = vmatprep.subr.bf16.mxu0 0
          %539 = vmatpush1.bf16.msra.mxu0 0
          %540 = vmatprep.subr.bf16.mxu0 0
          %541 = vmatpush1.bf16.msra.mxu0 0
          %542 = vmatprep.subr.bf16.mxu0 0
          %543 = vmatpush1.bf16.msra.mxu0 0
          %544 = vmatprep.subr.bf16.mxu0 0
          %545 = vmatpush1.bf16.msra.mxu0 0
          %546 = vmatprep.subr.bf16.mxu0 0
          %547 = vmatpush1.bf16.msra.mxu0 0
          %548 = vmatprep.subr.bf16.mxu0 0
          %549 = vmatpush1.bf16.msra.mxu0 0
          %550 = vmatprep.subr.bf16.mxu0 0
          %551 = vmatpush1.bf16.msra.mxu0 0
          %552 = vmatprep.mubr.bf16.mxu0 0
          %553 = vmatmul.mubr.bf16.gmra.mrb[0].mxu0 %v518
          %v554 = vpop.f32.mrb[0].mxu0
          %v555 = vadd.f32 0.0, %v554
          %v556 = vpop.f32.mrb[0].mxu0
          %v557 = vpop.f32.mrb[0].mxu0
          %v558 = vpop.f32.mrb[0].mxu0
          %559 = vdwg.mxu0
          %v564 = vunpack.c.l.b16 %v437
          %v565 = vunpack.c.l.b16 %v438
          %v566 = vunpack.c.l.b16 %v439
          %v567 = vunpack.c.l.b16 %v440
          %v568 = vpack.c.b16 %v565, %v564
          %v569 = vpack.c.b16 %v567, %v566
          %v573 = vsel %vm461, %v427, 0
          %575 = vmatprep.subr.bf16.mxu0 0
          %576 = vmatpush1.bf16.msra.mxu0 %v568
          %577 = vmatprep.subr.bf16.mxu0 0
          %578 = vmatpush1.bf16.msra.mxu0 %v569
          %579 = vmatprep.subr.bf16.mxu0 0
          %580 = vmatpush1.bf16.msra.mxu0 0
          %581 = vmatprep.subr.bf16.mxu0 0
          %582 = vmatpush1.bf16.msra.mxu0 0
          %583 = vmatprep.subr.bf16.mxu0 0
          %584 = vmatpush1.bf16.msra.mxu0 0
          %585 = vmatprep.subr.bf16.mxu0 0
          %586 = vmatpush1.bf16.msra.mxu0 0
          %587 = vmatprep.subr.bf16.mxu0 0
          %588 = vmatpush1.bf16.msra.mxu0 0
          %589 = vmatprep.subr.bf16.mxu0 0
          %590 = vmatpush1.bf16.msra.mxu0 0
          %591 = vmatprep.subr.bf16.mxu0 0
          %592 = vmatpush1.bf16.msra.mxu0 0
          %593 = vmatprep.subr.bf16.mxu0 0
          %594 = vmatpush1.bf16.msra.mxu0 0
          %595 = vmatprep.subr.bf16.mxu0 0
          %596 = vmatpush1.bf16.msra.mxu0 0
          %597 = vmatprep.subr.bf16.mxu0 0
          %598 = vmatpush1.bf16.msra.mxu0 0
          %599 = vmatprep.subr.bf16.mxu0 0
          %600 = vmatpush1.bf16.msra.mxu0 0
          %601 = vmatprep.subr.bf16.mxu0 0
          %602 = vmatpush1.bf16.msra.mxu0 0
          %603 = vmatprep.subr.bf16.mxu0 0
          %604 = vmatpush1.bf16.msra.mxu0 0
          %605 = vmatprep.subr.bf16.mxu0 0
          %606 = vmatpush1.bf16.msra.mxu0 0
          %607 = vmatprep.mubr.bf16.mxu0 0
          %608 = vmatmul.mubr.bf16.gmra.mrb[0].mxu0 %v573
          %v609 = vpop.f32.mrb[0].mxu0
          %v610 = vadd.f32 0.0, %v609
          %v611 = vpop.f32.mrb[0].mxu0
          %v612 = vpop.f32.mrb[0].mxu0
          %v613 = vpop.f32.mrb[0].mxu0
          %614 = vdwg.mxu0
          %v619 = vunpack.c.l.b16 %v441
          %v620 = vunpack.c.l.b16 %v442
          %v621 = vunpack.c.l.b16 %v443
          %v622 = vunpack.c.l.b16 %v444
          %v623 = vpack.c.b16 %v620, %v619
          %v624 = vpack.c.b16 %v622, %v621
          %v628 = vsel %vm461, %v428, 0
          %630 = vmatprep.subr.bf16.mxu0 0
          %631 = vmatpush1.bf16.msra.mxu0 %v623
          %632 = vmatprep.subr.bf16.mxu0 0
          %633 = vmatpush1.bf16.msra.mxu0 %v624
          %634 = vmatprep.subr.bf16.mxu0 0
          %635 = vmatpush1.bf16.msra.mxu0 0
          %636 = vmatprep.subr.bf16.mxu0 0
          %637 = vmatpush1.bf16.msra.mxu0 0
          %638 = vmatprep.subr.bf16.mxu0 0
          %639 = vmatpush1.bf16.msra.mxu0 0
          %640 = vmatprep.subr.bf16.mxu0 0
          %641 = vmatpush1.bf16.msra.mxu0 0
          %642 = vmatprep.subr.bf16.mxu0 0
          %643 = vmatpush1.bf16.msra.mxu0 0
          %644 = vmatprep.subr.bf16.mxu0 0
          %645 = vmatpush1.bf16.msra.mxu0 0
          %646 = vmatprep.subr.bf16.mxu0 0
          %647 = vmatpush1.bf16.msra.mxu0 0
          %648 = vmatprep.subr.bf16.mxu0 0
          %649 = vmatpush1.bf16.msra.mxu0 0
          %650 = vmatprep.subr.bf16.mxu0 0
          %651 = vmatpush1.bf16.msra.mxu0 0
          %652 = vmatprep.subr.bf16.mxu0 0
          %653 = vmatpush1.bf16.msra.mxu0 0
          %654 = vmatprep.subr.bf16.mxu0 0
          %655 = vmatpush1.bf16.msra.mxu0 0
          %656 = vmatprep.subr.bf16.mxu0 0
          %657 = vmatpush1.bf16.msra.mxu0 0
          %658 = vmatprep.subr.bf16.mxu0 0
          %659 = vmatpush1.bf16.msra.mxu0 0
          %660 = vmatprep.subr.bf16.mxu0 0
          %661 = vmatpush1.bf16.msra.mxu0 0
          %662 = vmatprep.mubr.bf16.mxu0 0
          %663 = vmatmul.mubr.bf16.gmra.mrb[0].mxu0 %v628
          %v664 = vpop.f32.mrb[0].mxu0
          %v665 = vadd.f32 0.0, %v664
          %v666 = vpop.f32.mrb[0].mxu0
          %v667 = vpop.f32.mrb[0].mxu0
          %v668 = vpop.f32.mrb[0].mxu0
          %669 = vdwg.mxu0
          %v670 = vld [vmem:[%s395] sm:$0x3]
          %vm671 = vnez %v670
          %v672 = vsel %vm671, 16843009, 0
          %v673 = vunpack.c.0.s8 %v672
          %vm674 = vcmp.ne.s32.totalorder %v673, 0
          %v675 = vsel %vm674, 1, 0
          %vm676 = vcmp.eq.s32.totalorder %v675, 1
          %v677 = vsel %vm676, -10000.0, %v500
          %v678 = vsel %vm676, -10000.0, %v555
          %v679 = vsel %vm676, -10000.0, %v610
          %v680 = vsel %vm676, -10000.0, %v665
          %v681 = vld [vmem:[#allocation2] sm:$0xff]
          %v682 = vld [vmem:[#allocation2 + $0x8] sm:$0xff]
          %v683 = vld [vmem:[#allocation2 + $0x10] sm:$0xff]
          %v684 = vld [vmem:[#allocation2 + $0x18] sm:$0xff]
          %vm685 = vcmask 64512
          %v686 = vsel %vm685, %v677, -inf
          %687 = vmax.xlane.f32.xlu0 %v686
          %v688 = vpop.xlane.xlu0 %687
          %v689 = vsel %vm685, %v678, -inf
          %690 = vmax.xlane.f32.xlu0 %v689
          %v691 = vpop.xlane.xlu0 %690
          %v692 = vsel %vm685, %v679, -inf
          %693 = vmax.xlane.f32.xlu0 %v692
          %v694 = vpop.xlane.xlu0 %693
          %v695 = vsel %vm685, %v680, -inf
          %696 = vmax.xlane.f32.xlu0 %v695
          %v697 = vpop.xlane.xlu0 %696
          %v698 = vmax.f32 %v681, %v688
          %v699 = vmax.f32 %v682, %v691
          %v700 = vmax.f32 %v683, %v694
          %v701 = vmax.f32 %v684, %v697
          %v702 = vsub.f32 %v681, %v698
          %v703 = vsub.f32 %v682, %v699
          %v704 = vsub.f32 %v683, %v700
          %v705 = vsub.f32 %v684, %v701
          %v706 = vmul.f32 %v702, 1.442695
          %v707 = vpow.pop %v706
          %v708 = vmul.f32 %v703, 1.442695
          %v709 = vpow.pop %v708
          %v710 = vmul.f32 %v704, 1.442695
          %v711 = vpow.pop %v710
          %v712 = vmul.f32 %v705, 1.442695
          %v713 = vpow.pop %v712
          %715 = vset.pattern.permute.xlu0 0
          %716 = vperm.xlu0 %715, %v698
          %v717 = vpop.permute.xlu0 %716
          %720 = vset.pattern.permute.xlu0 0
          %721 = vperm.xlu0 %720, %v699
          %v722 = vpop.permute.xlu0 %721
          %725 = vset.pattern.permute.xlu0 0
          %726 = vperm.xlu0 %725, %v700
          %v727 = vpop.permute.xlu0 %726
          %730 = vset.pattern.permute.xlu0 0
          %731 = vperm.xlu0 %730, %v701
          %v732 = vpop.permute.xlu0 %731
          %v734 = vsub.f32 %v677, %v717
          %v735 = vsub.f32 %v678, %v722
          %v736 = vsub.f32 %v679, %v727
          %v737 = vsub.f32 %v680, %v732
          %v738 = vpack.c.bf16 %v734, %v734
          %v739 = vpack.c.bf16 %v735, %v735
          %v740 = vpack.c.bf16 %v736, %v736
          %v741 = vpack.c.bf16 %v737, %v737
          %v743 = vmul.bf16 %v738, 1069105081
          %v744 = vpow.bf16.pop %v743
          %v746 = vmul.bf16 %v739, 1069105081
          %v747 = vpow.bf16.pop %v746
          %v749 = vmul.bf16 %v740, 1069105081
          %v750 = vpow.bf16.pop %v749
          %v752 = vmul.bf16 %v741, 1069105081
          %v753 = vpow.bf16.pop %v752
          %v754 = vld [vmem:[#allocation3] sm:$0xff]
          %v755 = vld [vmem:[#allocation3 + $0x8] sm:$0xff]
          %v756 = vld [vmem:[#allocation3 + $0x10] sm:$0xff]
          %v757 = vld [vmem:[#allocation3 + $0x18] sm:$0xff]
          %v758 = vmul.f32 %v707, %v754
          %v759 = vmul.f32 %v709, %v755
          %v760 = vmul.f32 %v711, %v756
          %v761 = vmul.f32 %v713, %v757
          %v762 = vunpack.c.l.bf16 %v744
          %v763 = vunpack.c.l.bf16 %v747
          %v764 = vunpack.c.l.bf16 %v750
          %v765 = vunpack.c.l.bf16 %v753
          %v766 = vsel %vm685, %v762, 0.0
          %767 = vadd.xlane.f32.xlu0 %v766
          %v768 = vpop.xlane.xlu0 %767
          %v769 = vsel %vm685, %v763, 0.0
          %770 = vadd.xlane.f32.xlu0 %v769
          %v771 = vpop.xlane.xlu0 %770
          %v772 = vsel %vm685, %v764, 0.0
          %773 = vadd.xlane.f32.xlu0 %v772
          %v774 = vpop.xlane.xlu0 %773
          %v775 = vsel %vm685, %v765, 0.0
          %776 = vadd.xlane.f32.xlu0 %v775
          %v777 = vpop.xlane.xlu0 %776
          %v778 = vadd.f32 %v758, %v768
          %v779 = vadd.f32 %v759, %v771
          %v780 = vadd.f32 %v760, %v774
          %v781 = vadd.f32 %v761, %v777
          %vm782 = vcmask 7168
          %783 = vst.msk [vmem:[#allocation3] sm:$0xff] %vm782, %v778
          %784 = vst.msk [vmem:[#allocation3 + $0x8] sm:$0xff] %vm782, %v779
          %785 = vst.msk [vmem:[#allocation3 + $0x10] sm:$0xff] %vm782, %v780
          %786 = vst.msk [vmem:[#allocation3 + $0x18] sm:$0xff] %vm782, %v781
          %v787 = vld [vmem:[#allocation4] sm:$0xff]
          %v788 = vld [vmem:[#allocation4 + $0x8] sm:$0xff]
          %v789 = vld [vmem:[#allocation4 + $0x10] sm:$0xff]
          %v790 = vld [vmem:[#allocation4 + $0x18] sm:$0xff]
          %792 = vset.pattern.permute.xlu0 0
          %793 = vperm.xlu0 %792, %v707
          %v794 = vpop.permute.xlu0 %793
          %797 = vset.pattern.permute.xlu0 0
          %798 = vperm.xlu0 %797, %v709
          %v799 = vpop.permute.xlu0 %798
          %802 = vset.pattern.permute.xlu0 0
          %803 = vperm.xlu0 %802, %v711
          %v804 = vpop.permute.xlu0 %803
          %807 = vset.pattern.permute.xlu0 0
          %808 = vperm.xlu0 %807, %v713
          %v809 = vpop.permute.xlu0 %808
          %v811 = vmul.f32 %v794, %v787
          %v812 = vmul.f32 %v799, %v788
          %v813 = vmul.f32 %v804, %v789
          %v814 = vmul.f32 %v809, %v790
          %v816 = vsel %vm685, %v744, 0
          %vm818 = vcmask 1043456
          %v820 = vsel %vm818, %v445, 0
          %822 = vmatprep.subr.bf16.mxu0 0
          %823 = vmatpush1.bf16.msra.mxu0 %v820
          %824 = vmatprep.subr.bf16.mxu0 0
          %825 = vmatpush1.bf16.msra.mxu0 0
          %826 = vmatprep.subr.bf16.mxu0 0
          %827 = vmatpush1.bf16.msra.mxu0 0
          %828 = vmatprep.subr.bf16.mxu0 0
          %829 = vmatpush1.bf16.msra.mxu0 0
          %830 = vmatprep.subr.bf16.mxu0 0
          %831 = vmatpush1.bf16.msra.mxu0 0
          %832 = vmatprep.subr.bf16.mxu0 0
          %833 = vmatpush1.bf16.msra.mxu0 0
          %834 = vmatprep.subr.bf16.mxu0 0
          %835 = vmatpush1.bf16.msra.mxu0 0
          %836 = vmatprep.subr.bf16.mxu0 0
          %837 = vmatpush1.bf16.msra.mxu0 0
          %838 = vmatprep.subr.bf16.mxu0 0
          %839 = vmatpush1.bf16.msra.mxu0 0
          %840 = vmatprep.subr.bf16.mxu0 0
          %841 = vmatpush1.bf16.msra.mxu0 0
          %842 = vmatprep.subr.bf16.mxu0 0
          %843 = vmatpush1.bf16.msra.mxu0 0
          %844 = vmatprep.subr.bf16.mxu0 0
          %845 = vmatpush1.bf16.msra.mxu0 0
          %846 = vmatprep.subr.bf16.mxu0 0
          %847 = vmatpush1.bf16.msra.mxu0 0
          %848 = vmatprep.subr.bf16.mxu0 0
          %849 = vmatpush1.bf16.msra.mxu0 0
          %850 = vmatprep.subr.bf16.mxu0 0
          %851 = vmatpush1.bf16.msra.mxu0 0
          %852 = vmatprep.subr.bf16.mxu0 0
          %853 = vmatpush1.bf16.msra.mxu0 0
          %854 = vmatprep.mubr.bf16.mxu0 0
          %855 = vmatmul.mubr.bf16.gmra.mrb[0].mxu0 %v816
          %v856 = vpop.f32.mrb[0].mxu0
          %v857 = vadd.f32 0.0, %v856
          %v858 = vpop.f32.mrb[0].mxu0
          %v859 = vpop.f32.mrb[0].mxu0
          %v860 = vpop.f32.mrb[0].mxu0
          %861 = vdwg.mxu0
          %v863 = vsel %vm685, %v747, 0
          %v866 = vsel %vm818, %v446, 0
          %868 = vmatprep.subr.bf16.mxu0 0
          %869 = vmatpush1.bf16.msra.mxu0 %v866
          %870 = vmatprep.subr.bf16.mxu0 0
          %871 = vmatpush1.bf16.msra.mxu0 0
          %872 = vmatprep.subr.bf16.mxu0 0
          %873 = vmatpush1.bf16.msra.mxu0 0
          %874 = vmatprep.subr.bf16.mxu0 0
          %875 = vmatpush1.bf16.msra.mxu0 0
          %876 = vmatprep.subr.bf16.mxu0 0
          %877 = vmatpush1.bf16.msra.mxu0 0
          %878 = vmatprep.subr.bf16.mxu0 0
          %879 = vmatpush1.bf16.msra.mxu0 0
          %880 = vmatprep.subr.bf16.mxu0 0
          %881 = vmatpush1.bf16.msra.mxu0 0
          %882 = vmatprep.subr.bf16.mxu0 0
          %883 = vmatpush1.bf16.msra.mxu0 0
          %884 = vmatprep.subr.bf16.mxu0 0
          %885 = vmatpush1.bf16.msra.mxu0 0
          %886 = vmatprep.subr.bf16.mxu0 0
          %887 = vmatpush1.bf16.msra.mxu0 0
          %888 = vmatprep.subr.bf16.mxu0 0
          %889 = vmatpush1.bf16.msra.mxu0 0
          %890 = vmatprep.subr.bf16.mxu0 0
          %891 = vmatpush1.bf16.msra.mxu0 0
          %892 = vmatprep.subr.bf16.mxu0 0
          %893 = vmatpush1.bf16.msra.mxu0 0
          %894 = vmatprep.subr.bf16.mxu0 0
          %895 = vmatpush1.bf16.msra.mxu0 0
          %896 = vmatprep.subr.bf16.mxu0 0
          %897 = vmatpush1.bf16.msra.mxu0 0
          %898 = vmatprep.subr.bf16.mxu0 0
          %899 = vmatpush1.bf16.msra.mxu0 0
          %900 = vmatprep.mubr.bf16.mxu0 0
          %901 = vmatmul.mubr.bf16.gmra.mrb[0].mxu0 %v863
          %v902 = vpop.f32.mrb[0].mxu0
          %v903 = vadd.f32 0.0, %v902
          %v904 = vpop.f32.mrb[0].mxu0
          %v905 = vpop.f32.mrb[0].mxu0
          %v906 = vpop.f32.mrb[0].mxu0
          %907 = vdwg.mxu0
          %v909 = vsel %vm685, %v750, 0
          %v912 = vsel %vm818, %v447, 0
          %914 = vmatprep.subr.bf16.mxu0 0
          %915 = vmatpush1.bf16.msra.mxu0 %v912
          %916 = vmatprep.subr.bf16.mxu0 0
          %917 = vmatpush1.bf16.msra.mxu0 0
          %918 = vmatprep.subr.bf16.mxu0 0
          %919 = vmatpush1.bf16.msra.mxu0 0
          %920 = vmatprep.subr.bf16.mxu0 0
          %921 = vmatpush1.bf16.msra.mxu0 0
          %922 = vmatprep.subr.bf16.mxu0 0
          %923 = vmatpush1.bf16.msra.mxu0 0
          %924 = vmatprep.subr.bf16.mxu0 0
          %925 = vmatpush1.bf16.msra.mxu0 0
          %926 = vmatprep.subr.bf16.mxu0 0
          %927 = vmatpush1.bf16.msra.mxu0 0
          %928 = vmatprep.subr.bf16.mxu0 0
          %929 = vmatpush1.bf16.msra.mxu0 0
          %930 = vmatprep.subr.bf16.mxu0 0
          %931 = vmatpush1.bf16.msra.mxu0 0
          %932 = vmatprep.subr.bf16.mxu0 0
          %933 = vmatpush1.bf16.msra.mxu0 0
          %934 = vmatprep.subr.bf16.mxu0 0
          %935 = vmatpush1.bf16.msra.mxu0 0
          %936 = vmatprep.subr.bf16.mxu0 0
          %937 = vmatpush1.bf16.msra.mxu0 0
          %938 = vmatprep.subr.bf16.mxu0 0
          %939 = vmatpush1.bf16.msra.mxu0 0
          %940 = vmatprep.subr.bf16.mxu0 0
          %941 = vmatpush1.bf16.msra.mxu0 0
          %942 = vmatprep.subr.bf16.mxu0 0
          %943 = vmatpush1.bf16.msra.mxu0 0
          %944 = vmatprep.subr.bf16.mxu0 0
          %945 = vmatpush1.bf16.msra.mxu0 0
          %946 = vmatprep.mubr.bf16.mxu0 0
          %947 = vmatmul.mubr.bf16.gmra.mrb[0].mxu0 %v909
          %v948 = vpop.f32.mrb[0].mxu0
          %v949 = vadd.f32 0.0, %v948
          %v950 = vpop.f32.mrb[0].mxu0
          %v951 = vpop.f32.mrb[0].mxu0
          %v952 = vpop.f32.mrb[0].mxu0
          %953 = vdwg.mxu0
          %v955 = vsel %vm685, %v753, 0
          %v958 = vsel %vm818, %v448, 0
          %960 = vmatprep.subr.bf16.mxu0 0
          %961 = vmatpush1.bf16.msra.mxu0 %v958
          %962 = vmatprep.subr.bf16.mxu0 0
          %963 = vmatpush1.bf16.msra.mxu0 0
          %964 = vmatprep.subr.bf16.mxu0 0
          %965 = vmatpush1.bf16.msra.mxu0 0
          %966 = vmatprep.subr.bf16.mxu0 0
          %967 = vmatpush1.bf16.msra.mxu0 0
          %968 = vmatprep.subr.bf16.mxu0 0
          %969 = vmatpush1.bf16.msra.mxu0 0
          %970 = vmatprep.subr.bf16.mxu0 0
          %971 = vmatpush1.bf16.msra.mxu0 0
          %972 = vmatprep.subr.bf16.mxu0 0
          %973 = vmatpush1.bf16.msra.mxu0 0
          %974 = vmatprep.subr.bf16.mxu0 0
          %975 = vmatpush1.bf16.msra.mxu0 0
          %976 = vmatprep.subr.bf16.mxu0 0
          %977 = vmatpush1.bf16.msra.mxu0 0
          %978 = vmatprep.subr.bf16.mxu0 0
          %979 = vmatpush1.bf16.msra.mxu0 0
          %980 = vmatprep.subr.bf16.mxu0 0
          %981 = vmatpush1.bf16.msra.mxu0 0
          %982 = vmatprep.subr.bf16.mxu0 0
          %983 = vmatpush1.bf16.msra.mxu0 0
          %984 = vmatprep.subr.bf16.mxu0 0
          %985 = vmatpush1.bf16.msra.mxu0 0
          %986 = vmatprep.subr.bf16.mxu0 0
          %987 = vmatpush1.bf16.msra.mxu0 0
          %988 = vmatprep.subr.bf16.mxu0 0
          %989 = vmatpush1.bf16.msra.mxu0 0
          %990 = vmatprep.subr.bf16.mxu0 0
          %991 = vmatpush1.bf16.msra.mxu0 0
          %992 = vmatprep.mubr.bf16.mxu0 0
          %993 = vmatmul.mubr.bf16.gmra.mrb[0].mxu0 %v955
          %v994 = vpop.f32.mrb[0].mxu0
          %v995 = vadd.f32 0.0, %v994
          %v996 = vpop.f32.mrb[0].mxu0
          %v997 = vpop.f32.mrb[0].mxu0
          %v998 = vpop.f32.mrb[0].mxu0
          %999 = vdwg.mxu0
          %v1000 = vadd.f32 %v811, %v857
          %v1001 = vadd.f32 %v812, %v903
          %v1002 = vadd.f32 %v813, %v949
          %v1003 = vadd.f32 %v814, %v995
          %1004 = vst.msk [vmem:[#allocation4] sm:$0xff] %vm461, %v1000
          %1005 = vst.msk [vmem:[#allocation4 + $0x8] sm:$0xff] %vm461, %v1001
          %1006 = vst.msk [vmem:[#allocation4 + $0x10] sm:$0xff] %vm461, %v1002
          %1007 = vst.msk [vmem:[#allocation4 + $0x18] sm:$0xff] %vm461, %v1003
          %1008 = vst.msk [vmem:[#allocation2] sm:$0xff] %vm782, %v698
          %1009 = vst.msk [vmem:[#allocation2 + $0x8] sm:$0xff] %vm782, %v699
          %1010 = vst.msk [vmem:[#allocation2 + $0x10] sm:$0xff] %vm782, %v700
          %1011 = vst.msk [vmem:[#allocation2 + $0x18] sm:$0xff] %vm782, %v701
        $region44: #{tpu_custom_call.1} parent=35 // pred_fallthru
          _
        // Predicated region
        $region45: #{tpu_custom_call.1} parent=35 // pred_check
          %p1012 = pneg %p400
        $region46: #{tpu_custom_call.1} parent=35 // pred_check_branch
          %1014 = sbr.rel (%p1012) target = $region48
        $region47: #{tpu_custom_call.1} parent=35 // pred_region
          %v1015 = vld [vmem:[#allocation3] sm:$0xff]
          %v1016 = vld [vmem:[#allocation3 + $0x8] sm:$0xff]
          %v1017 = vld [vmem:[#allocation3 + $0x10] sm:$0xff]
          %v1018 = vld [vmem:[#allocation3 + $0x18] sm:$0xff]
          %v1019 = vrcp.pop %v1015
          %v1020 = vrcp.pop %v1016
          %v1021 = vrcp.pop %v1017
          %v1022 = vrcp.pop %v1018
          %v1023 = vld [vmem:[#allocation4] sm:$0xff]
          %v1024 = vld [vmem:[#allocation4 + $0x8] sm:$0xff]
          %v1025 = vld [vmem:[#allocation4 + $0x10] sm:$0xff]
          %v1026 = vld [vmem:[#allocation4 + $0x18] sm:$0xff]
          %1028 = vset.pattern.permute.xlu0 0
          %1029 = vperm.xlu0 %1028, %v1019
          %v1030 = vpop.permute.xlu0 %1029
          %1033 = vset.pattern.permute.xlu0 0
          %1034 = vperm.xlu0 %1033, %v1020
          %v1035 = vpop.permute.xlu0 %1034
          %1038 = vset.pattern.permute.xlu0 0
          %1039 = vperm.xlu0 %1038, %v1021
          %v1040 = vpop.permute.xlu0 %1039
          %1043 = vset.pattern.permute.xlu0 0
          %1044 = vperm.xlu0 %1043, %v1022
          %v1045 = vpop.permute.xlu0 %1044
          %v1047 = vmul.f32 %v1023, %v1030
          %v1048 = vmul.f32 %v1024, %v1035
          %v1049 = vmul.f32 %v1025, %v1040
          %v1050 = vmul.f32 %v1026, %v1045
          %vm1051 = vcmask 261120
          %1052 = vst.msk [vmem:[%s345] sm:$0xff] %vm1051, %v1047
          %1054 = vrot.lane.b32.xlu0 %v1048, 32
          %v1055 = vpop.permute.xlu0 %1054
          %vm1057 = vcmask 523520
          %1058 = vst.msk [vmem:[%s345] sm:$0xff] %vm1057, %v1055
          %1060 = vrot.lane.b32.xlu0 %v1049, 64
          %v1061 = vpop.permute.xlu0 %1060
          %vm1063 = vcmask 785920
          %1064 = vst.msk [vmem:[%s345] sm:$0xff] %vm1063, %v1061
          %1066 = vrot.lane.b32.xlu0 %v1050, 96
          %v1067 = vpop.permute.xlu0 %1066
          %vm1069 = vcmask 1048320
          %1070 = vst.msk [vmem:[%s345] sm:$0xff] %vm1069, %v1067
        $region48: #{tpu_custom_call.1} parent=35 // pred_fallthru
          _
        %s1071 = sand.u32 %s183, 1
        %s1072 = scalar_lea.sflag [#allocation8], %s1071
        %s1073 = sand.u32 %s183, 1
        %s1074 = smul.addr %s1073, 8
        %s1075 = scalar_lea.vmem [#allocation7], %s1074
        // Predicated region
        $region49: #{tpu_custom_call.1} parent=35 // pred_check
          %p1076 = pneg %p193
        $region50: #{tpu_custom_call.1} parent=35 // pred_check_branch
          %1078 = sbr.rel (%p1076) target = $region52
        $region51: #{tpu_custom_call.1} parent=35 // pred_region
          %s1079 = sadd.s32 %s31, %s32
          %s1081 = ssub.s32 128, 128
          %1082 = vsyncadd %s1072, %s1081
          %s1083 = smul.addr %s33, 2
          %s1084 = sadd.s32 %s1079, %s1083
          %s1085 = smul.addr %s1084, 128
          %s1086 = scalar_lea.hbm %s5, %s1085
          %s1088 = sshll.u32 %s1075, 4
          %s1089 = int_to_ptr.vmem [resolvable:$true] %s1088
          %1091 = dma.vmem_to_hbm [thread:$0]  %s1089, 128, %s1086, %s1072
        $region52: #{tpu_custom_call.1} parent=35 // pred_fallthru
          _
      $region36: #{tpu_custom_call.1} parent=5 // pred_fallthru
        _
      %p1092 = scmp.le.s32.totalorder 2, %s20
      // Predicated region
      $region53: #{tpu_custom_call.1} parent=5 // pred_check
        %p1093 = pneg %p1092
      $region54: #{tpu_custom_call.1} parent=5 // pred_check_branch
        %1095 = sbr.rel (%p1093) target = $region56
      $region55: #{tpu_custom_call.1} parent=5 // pred_region
        %s1096 = ssub.s32 %s20, 2
        // Predicated region
        $region57: #{tpu_custom_call.1} parent=55 // pred_check
          %p1097 = pneg %p199
        $region58: #{tpu_custom_call.1} parent=55 // pred_check_branch
          %1099 = sbr.rel (%p1097) target = $region60
        $region59: #{tpu_custom_call.1} parent=55 // pred_region
          %s1100 = sand.u32 %s184, 1
          %s1101 = scalar_lea.sflag [#allocation8], %s1100
          %s1102 = sand.u32 %s184, 1
          %s1103 = smul.addr %s1102, 8
          %s1104 = scalar_lea.vmem [#allocation7], %s1103
          %1105 = dma.done %s1101, 128
        $region60: #{tpu_custom_call.1} parent=55 // pred_fallthru
          _
      $region56: #{tpu_custom_call.1} parent=5 // pred_fallthru
        _
    $region6: #{tpu_custom_call.1} parent=1 // loop_footer
      %s24 = sadd.s32 1, %s20
    $region7: #{tpu_custom_call.1} parent=1 // loop_footer_branch
      %19 = sbr.rel target = $region3
    $region8: #{tpu_custom_call.1} parent=1 // loop_exit
      _
    %1106 = vsyncpa [#allocation8], 1
    %s1107 = scalar_lea.sflag [#allocation8], 1
    %1108 = vsyncpa %s1107, 1

</llo_original>
